<compile_context>
chip_gen: v5e
topology: v5e:2x2
jax: 0.10.0
libtpu: 0.0.40
codegen_flags: <defaults>
</compile_context>

<pallas_src>
import functools

import jax
import jax.numpy as jnp
from jax import lax
from jax.experimental import pallas as pl
from jax.experimental.pallas import tpu as pltpu


def _atloss_kernel(s_ref, t_ref, out_ref, *, hw, tile_hw, c):
    # s_ref / t_ref: (1, C, TILE_HW) block of the (B, C, H*W) input.
    s = s_ref[...].astype(jnp.float32)
    t = t_ref[...].astype(jnp.float32)
    diff = s - t                                            # reused by both terms

    # ---- loss_AT per spatial position: (mean_C s - mean_C t)^2.
    d = jnp.sum(diff, axis=1, keepdims=True) * jnp.float32(1.0 / c)    # (1,1,T)
    sq = d * d

    # ---- loss_PD per spatial position: KL(softmax_C(t) || softmax_C(s)).
    # With sum_C p_t == 1:
    #   kl = -sum_C p_t * diff + (s_max - t_max) + log(sum_s) - log(sum_t)
    s_max = jnp.max(s, axis=1, keepdims=True)
    t_max = jnp.max(t, axis=1, keepdims=True)
    e_s = jnp.exp(s - s_max)
    e_t = jnp.exp(t - t_max)
    sum_s = jnp.sum(e_s, axis=1, keepdims=True)
    sum_t = jnp.sum(e_t, axis=1, keepdims=True)
    wsum = jnp.sum(e_t * diff, axis=1, keepdims=True)                  # (1,1,T)
    kl = ((s_max - t_max) + jnp.log(sum_s) - jnp.log(sum_t)
          - wsum * pl.reciprocal(sum_t))

    contrib = sq + kl                                                  # (1,1,T)

    if hw % tile_hw != 0:
        # Partial last tile: mask only the per-position contributions (the
        # mask is (1,1,T), not block-sized). OOB lanes never mix with valid
        # lanes because every op above is per-lane or a sublane reduce, and
        # jnp.where is a select, so OOB garbage/NaN cannot propagate.
        j = pl.program_id(1)
        col = lax.broadcasted_iota(jnp.int32, contrib.shape, 2)
        contrib = jnp.where(col < hw - j * tile_hw, contrib, 0.0)

    tile_sum = jnp.sum(contrib)
    # (1,1,8,128) block -> fully aligned, unmasked store; wrapper reads [0,0].
    out_ref[...] = jnp.zeros_like(out_ref) + tile_sum


def _pick_tile_hw(hw, c, b):
    # Budget with the in-kernel f32 working set: inputs are cast to f32 and C
    # occupies whole 8-sublane packs regardless of its value or input dtype.
    c_pad = ((c + 7) // 8) * 8
    # ~2 MiB per input block (f32-equivalent): hides the ~0.35 us per-step
    # overhead even at v7x HBM rates, while 2 inputs x 2 pipeline buffers +
    # ~5 f32 block temporaries stay well inside v7x's 64 MiB physical VMEM.
    target_elems = max(128, (2 << 20) // (c_pad * 4))
    if hw <= target_elems:
        tile = hw
    else:
        tile = max(128, (target_elems // 128) * 128)
    # Megacore: if the grid would have < 4 steps, split the spatial axis
    # further so both v7x TensorCores get work (both grid axes are parallel).
    j_tiles = -(-hw // tile)
    while b * j_tiles < 4 and tile > 128:
        tile = max(128, ((tile // 2) // 128) * 128)
        j_tiles = -(-hw // tile)
    return tile


@functools.partial(jax.jit, static_argnames=("tile_hw",))
def atloss_pallas(x_student, x_teacher, tile_hw=None):
    """x_student, x_teacher: NCHW arrays of identical shape (f32 or bf16)."""
    B, C, H, W = x_student.shape
    hw = H * W
    n = B * hw                               # numel / C

    # Free reshape (contiguous merge of trailing dims): no transpose, no pad.
    s3 = x_student.reshape(B, C, hw)
    t3 = x_teacher.reshape(B, C, hw)

    if tile_hw is None:
        tile_hw = _pick_tile_hw(hw, C, B)
    j_tiles = pl.cdiv(hw, tile_hw)

    kernel = functools.partial(_atloss_kernel, hw=hw, tile_hw=tile_hw, c=C)

    numel = B * C * hw
    itemsize = jnp.dtype(x_student.dtype).itemsize
    cost = pl.CostEstimate(
        flops=8 * numel,
        transcendentals=2 * numel,
        bytes_accessed=2 * numel * itemsize + B * j_tiles * 8 * 128 * 4,
    )

    partials = pl.pallas_call(
        kernel,
        out_shape=jax.ShapeDtypeStruct((B, j_tiles, 8, 128), jnp.float32),
        grid_spec=pltpu.PrefetchScalarGridSpec(
            num_scalar_prefetch=0,
            grid=(B, j_tiles),
            in_specs=[
                pl.BlockSpec((1, C, tile_hw), lambda b, j: (b, 0, j)),
                pl.BlockSpec((1, C, tile_hw), lambda b, j: (b, 0, j)),
            ],
            out_specs=pl.BlockSpec((1, 1, 8, 128), lambda b, j: (b, j, 0, 0)),
        ),
        compiler_params=pltpu.CompilerParams(
            dimension_semantics=("parallel", "parallel"),
            vmem_limit_bytes=48 * 1024 * 1024,
        ),
        cost_estimate=cost,
    )(s3, t3)

    # loss = MSE_mean + KLD_sum / (numel / C)  ==  total / (B*H*W)
    return jnp.sum(partials[:, :, 0, 0]) / jnp.float32(n)


def _atloss_reference(x_student, x_teacher):
    """Plain-JAX reference mirroring the PyTorch module."""
    m_s = jnp.mean(x_student, axis=1)
    m_t = jnp.mean(x_teacher, axis=1)
    loss_at = jnp.mean((m_s - m_t) ** 2)
    logp_s = jax.nn.log_softmax(x_student, axis=1)
    p_t = jax.nn.softmax(x_teacher, axis=1)
    kld = jnp.sum(p_t * (jnp.log(p_t) - logp_s))
    n = x_student.size / x_student.shape[1]
    return loss_at + kld / n


if __name__ == "__main__":
    key = jax.random.PRNGKey(0)
    k1, k2, k3, k4 = jax.random.split(key, 4)

    # Main check (shapes consistent with the module).
    shape = (2, 4, 16, 16)                   # (B, C, H, W)
    x_student = jax.random.normal(k1, shape, dtype=jnp.float32)
    x_teacher = jax.random.normal(k2, shape, dtype=jnp.float32)
    loss = atloss_pallas(x_student, x_teacher)
    jax.block_until_ready(loss)
    ref = _atloss_reference(x_student, x_teacher)
    assert jnp.allclose(loss, ref, rtol=1e-5, atol=1e-5), (loss, ref)

    # Exercise the multi-tile + masked-remainder path with a forced small tile.
    shape2 = (2, 4, 18, 17)                  # H*W = 306, not a 128-multiple
    xs2 = jax.random.normal(k3, shape2, dtype=jnp.float32)
    xt2 = jax.random.normal(k4, shape2, dtype=jnp.float32)
    loss2 = atloss_pallas(xs2, xt2, tile_hw=128)
    jax.block_until_ready(loss2)
    ref2 = _atloss_reference(xs2, xt2)
    assert jnp.allclose(loss2, ref2, rtol=1e-5, atol=1e-5), (loss2, ref2)

    print("KERNEL_OK")
</pallas_src>

<mosaic_0001>
module attributes {stable_mosaic.version = 11 : i64} {
  func.func @_atloss_kernel(%arg0: i32, %arg1: i32, %arg2: memref<1x4x128xf32, #tpu.memory_space<vmem>>, %arg3: memref<1x4x128xf32, #tpu.memory_space<vmem>>, %arg4: memref<1x1x8x128xf32, #tpu.memory_space<vmem>>) attributes {dimension_semantics = [#tpu.dimension_semantics<parallel>, #tpu.dimension_semantics<parallel>], iteration_bounds = array<i64: 2, 2>, scalar_prefetch = 0 : i64, scratch_operands = 0 : i64, tpu.core_type = #tpu.core_type<tc>, window_params = [{transform_indices = @transform_0, window_bounds = array<i64: 1, 4, 128>}, {transform_indices = @transform_1, window_bounds = array<i64: 1, 4, 128>}, {transform_indices = @transform_2, window_bounds = array<i64: 1, 1, 8, 128>}]} {
    %c0 = arith.constant 0 : index
    %c0_0 = arith.constant 0 : index
    %c0_1 = arith.constant 0 : index
    %0 = vector.load %arg2[%c0, %c0_0, %c0_1] : memref<1x4x128xf32, #tpu.memory_space<vmem>>, vector<1x4x128xf32>
    %c0_2 = arith.constant 0 : index
    %c0_3 = arith.constant 0 : index
    %c0_4 = arith.constant 0 : index
    %1 = vector.load %arg3[%c0_2, %c0_3, %c0_4] : memref<1x4x128xf32, #tpu.memory_space<vmem>>, vector<1x4x128xf32>
    %2 = arith.subf %0, %1 : vector<1x4x128xf32>
    %cst = arith.constant dense<0.000000e+00> : vector<1x128xf32>
    %3 = vector.multi_reduction <add>, %2, %cst [1] : vector<1x4x128xf32> to vector<1x128xf32>
    %4 = vector.shape_cast %3 : vector<1x128xf32> to vector<1x1x128xf32>
    %cst_5 = arith.constant 2.500000e-01 : f32
    %5 = vector.broadcast %cst_5 : f32 to vector<1x1x128xf32>
    %6 = arith.mulf %4, %5 : vector<1x1x128xf32>
    %7 = arith.mulf %6, %6 : vector<1x1x128xf32>
    %cst_6 = arith.constant dense<0xFF800000> : vector<1x128xf32>
    %8 = vector.multi_reduction <maximumf>, %0, %cst_6 [1] : vector<1x4x128xf32> to vector<1x128xf32>
    %9 = vector.shape_cast %8 : vector<1x128xf32> to vector<1x1x128xf32>
    %cst_7 = arith.constant dense<0xFF800000> : vector<1x128xf32>
    %10 = vector.multi_reduction <maximumf>, %1, %cst_7 [1] : vector<1x4x128xf32> to vector<1x128xf32>
    %11 = vector.shape_cast %10 : vector<1x128xf32> to vector<1x1x128xf32>
    %12 = vector.broadcast %9 : vector<1x1x128xf32> to vector<1x4x128xf32>
    %13 = arith.subf %0, %12 : vector<1x4x128xf32>
    %14 = math.exp %13 : vector<1x4x128xf32>
    %15 = vector.broadcast %11 : vector<1x1x128xf32> to vector<1x4x128xf32>
    %16 = arith.subf %1, %15 : vector<1x4x128xf32>
    %17 = math.exp %16 : vector<1x4x128xf32>
    %cst_8 = arith.constant dense<0.000000e+00> : vector<1x128xf32>
    %18 = vector.multi_reduction <add>, %14, %cst_8 [1] : vector<1x4x128xf32> to vector<1x128xf32>
    %19 = vector.shape_cast %18 : vector<1x128xf32> to vector<1x1x128xf32>
    %cst_9 = arith.constant dense<0.000000e+00> : vector<1x128xf32>
    %20 = vector.multi_reduction <add>, %17, %cst_9 [1] : vector<1x4x128xf32> to vector<1x128xf32>
    %21 = vector.shape_cast %20 : vector<1x128xf32> to vector<1x1x128xf32>
    %22 = arith.mulf %17, %2 : vector<1x4x128xf32>
    %cst_10 = arith.constant dense<0.000000e+00> : vector<1x128xf32>
    %23 = vector.multi_reduction <add>, %22, %cst_10 [1] : vector<1x4x128xf32> to vector<1x128xf32>
    %24 = vector.shape_cast %23 : vector<1x128xf32> to vector<1x1x128xf32>
    %25 = arith.subf %9, %11 : vector<1x1x128xf32>
    %26 = math.log %19 : vector<1x1x128xf32>
    %27 = arith.addf %25, %26 : vector<1x1x128xf32>
    %28 = math.log %21 : vector<1x1x128xf32>
    %29 = arith.subf %27, %28 : vector<1x1x128xf32>
    %30 = tpu.reciprocal %21 : vector<1x1x128xf32> -> vector<1x1x128xf32>
    %31 = arith.mulf %24, %30 : vector<1x1x128xf32>
    %32 = arith.subf %29, %31 : vector<1x1x128xf32>
    %33 = arith.addf %7, %32 : vector<1x1x128xf32>
    %34 = vector.shape_cast %33 : vector<1x1x128xf32> to vector<1x1x1x128xf32>
    %cst_11 = arith.constant dense<0.000000e+00> : vector<1xf32>
    %35 = vector.multi_reduction <add>, %34, %cst_11 [1, 2, 3] : vector<1x1x1x128xf32> to vector<1xf32>
    %36 = vector.shape_cast %35 : vector<1xf32> to vector<1x1x1x1xf32>
    %37 = vector.extract %36[0, 0, 0, 0] : f32 from vector<1x1x1x1xf32>
    %cst_12 = arith.constant 0.000000e+00 : f32
    %38 = vector.broadcast %cst_12 : f32 to vector<1x1x8x128xf32>
    %39 = vector.broadcast %37 : f32 to vector<1x1x8x128xf32>
    %40 = arith.addf %38, %39 : vector<1x1x8x128xf32>
    %c0_13 = arith.constant 0 : index
    %c0_14 = arith.constant 0 : index
    %c0_15 = arith.constant 0 : index
    %c0_16 = arith.constant 0 : index
    %41 = vector.load %arg4[%c0_13, %c0_14, %c0_15, %c0_16] : memref<1x1x8x128xf32, #tpu.memory_space<vmem>>, vector<1x1x8x128xf32>
    tpu.vector_store %arg4[%c0_13, %c0_14, %c0_15, %c0_16], %40 {strides = array<i32>} : memref<1x1x8x128xf32, #tpu.memory_space<vmem>>, vector<1x1x8x128xf32>,
    return
  }
  func.func @transform_0(%arg0: i32, %arg1: i32) -> (i32, i32, i32) {
    %c0_i32 = arith.constant 0 : i32
    %c0_i32_0 = arith.constant 0 : i32
    return %arg0, %c0_i32, %arg1 : i32, i32, i32
  }
  func.func @transform_1(%arg0: i32, %arg1: i32) -> (i32, i32, i32) {
    %c0_i32 = arith.constant 0 : i32
    %c0_i32_0 = arith.constant 0 : i32
    return %arg0, %c0_i32, %arg1 : i32, i32, i32
  }
  func.func @transform_2(%arg0: i32, %arg1: i32) -> (i32, i32, i32, i32) {
    %c0_i32 = arith.constant 0 : i32
    %c0_i32_0 = arith.constant 0 : i32
    %c0_i32_1 = arith.constant 0 : i32
    return %arg0, %arg1, %c0_i32, %c0_i32_0 : i32, i32, i32, i32
  }
}

</mosaic_0001>

<llo_original>
// kernel: atloss_pallas.1
$region0: #{atloss_pallas.1}
  #allocation0 [shape = 'u32[]', space=smem, size = 0x4, offset = 0x4, fixed_abs, tag = 'smem constant byte address 0x4 - core index']
  #allocation1 [shape = 'u32[72,128]{1,0:T(1,128)}', space=vmem, size = 0x9000, scoped, tag = 'internal scratch']
  %s0 = inlined_call_operand.vmem [shape: f32[2,4,256], index: 0, kind: input, shape index: {}]
  %s1 = inlined_call_operand.vmem [shape: f32[2,4,256], index: 1, kind: input, shape index: {}]
  %s2 = inlined_call_operand.vmem [shape: f32[2,2,8,128], index: 2, kind: output, shape index: {}]
  %s3 = sld [smem:[#allocation0]]
  $region41: #{atloss_pallas.1} parent=0
    _
  %s5 = ssub.s32 1, %s3
  %s6 = scalar_select 0, %s5, %s3
  loop: start=0, step=1, limit=6
  $region2: #{atloss_pallas.1} parent=0 // loop_pre_header
    _
  $region3: #{atloss_pallas.1} parent=0 // loop_header
    %s8 = sphi 0, %s12
    %p9 = scmp.ge.s32.totalorder %s8, 6
    %s15 = sphi 0, %s27
    %s16 = sphi 0, %s23
    %s17 = sphi 0, %s15
    %s18 = sphi 0, %s16
    %s19 = sphi 0, %s17
    %s20 = sphi 0, %s18
    %s32 = sphi 0, %s34
    %s35 = sphi 0, %s32
    %s36 = sphi 0, %s35
    %s52 = sphi 0, %s36
    %s60 = sphi 0, %s62
    %s63 = sphi 0, %s60
    %s64 = sphi 0, %s63
    %s80 = sphi 0, %s64
    %s88 = sphi 0, %s90
    %s91 = sphi 0, %s88
    %s92 = sphi 0, %s91
    %s108 = sphi 0, %s92
  $region4: #{atloss_pallas.1} parent=0 // loop_header_branch
    %11 = sbr.rel (%p9) target = $region8
  $region5: #{atloss_pallas.1} parent=0 // loop_body
    %s13 = ssub.s32 %s8, 1
    %s14 = ssub.s32 %s8, 2
    %s21 = sadd.s32 1, %s16
    %p22 = scmp.ge.s32.totalorder %s21, 2
    %s23 = scalar_select %p22, 0, %s21
    %s24 = sadd.s32 1, %s15
    %s25 = scalar_select %p22, %s24, %s15
    %p26 = scmp.ge.s32.totalorder %s25, 2
    %s27 = scalar_select %p26, 0, %s25
    %s28 = ssub.s32 %s15, %s27
    %s29 = ssub.s32 %s16, %s23
    %s30 = sor.u32 %s28, %s29
    %p31 = scmp.eq.s32.totalorder %s30, 0
    %s33 = sadd.s32 %s32, 1
    %s34 = scalar_select %p31, %s32, %s33
    %p37 = pneg %p31
    %p38 = scmp.eq.s32.totalorder %s8, 3
    %p39 = por %p37, %p38
    %p40 = scmp.ne.s32.totalorder %s32, %s35
    %p41 = scmp.eq.s32.totalorder %s8, 0
    %p42 = por %p40, %p41
    %p43 = scmp.ne.s32.totalorder %s32, %s35
    %p44 = scmp.eq.s32.totalorder %s13, 3
    %p45 = por %p43, %p44
    %p46 = scmp.ne.s32.totalorder %s35, %s36
    %p47 = scmp.eq.s32.totalorder %s13, 0
    %p48 = por %p46, %p47
    %p49 = scmp.ne.s32.totalorder %s35, %s36
    %p50 = scmp.eq.s32.totalorder %s14, 3
    %p51 = por %p49, %p50
    %p53 = scmp.ne.s32.totalorder %s36, %s52
    %p54 = scmp.eq.s32.totalorder %s14, 0
    %p55 = por %p53, %p54
    %s56 = ssub.s32 %s15, %s27
    %s57 = ssub.s32 %s16, %s23
    %s58 = sor.u32 %s56, %s57
    %p59 = scmp.eq.s32.totalorder %s58, 0
    %s61 = sadd.s32 %s60, 1
    %s62 = scalar_select %p59, %s60, %s61
    %p65 = pneg %p59
    %p66 = scmp.eq.s32.totalorder %s8, 3
    %p67 = por %p65, %p66
    %p68 = scmp.ne.s32.totalorder %s60, %s63
    %p69 = scmp.eq.s32.totalorder %s8, 0
    %p70 = por %p68, %p69
    %p71 = scmp.ne.s32.totalorder %s60, %s63
    %p72 = scmp.eq.s32.totalorder %s13, 3
    %p73 = por %p71, %p72
    %p74 = scmp.ne.s32.totalorder %s63, %s64
    %p75 = scmp.eq.s32.totalorder %s13, 0
    %p76 = por %p74, %p75
    %p77 = scmp.ne.s32.totalorder %s63, %s64
    %p78 = scmp.eq.s32.totalorder %s14, 3
    %p79 = por %p77, %p78
    %p81 = scmp.ne.s32.totalorder %s64, %s80
    %p82 = scmp.eq.s32.totalorder %s14, 0
    %p83 = por %p81, %p82
    %s84 = ssub.s32 %s15, %s27
    %s85 = ssub.s32 %s16, %s23
    %s86 = sor.u32 %s84, %s85
    %p87 = scmp.eq.s32.totalorder %s86, 0
    %s89 = sadd.s32 %s88, 1
    %s90 = scalar_select %p87, %s88, %s89
    %p93 = pneg %p87
    %p94 = scmp.eq.s32.totalorder %s8, 3
    %p95 = por %p93, %p94
    %p96 = scmp.ne.s32.totalorder %s88, %s91
    %p97 = scmp.eq.s32.totalorder %s8, 0
    %p98 = por %p96, %p97
    %p99 = scmp.ne.s32.totalorder %s88, %s91
    %p100 = scmp.eq.s32.totalorder %s13, 3
    %p101 = por %p99, %p100
    %p102 = scmp.ne.s32.totalorder %s91, %s92
    %p103 = scmp.eq.s32.totalorder %s13, 0
    %p104 = por %p102, %p103
    %p105 = scmp.ne.s32.totalorder %s91, %s92
    %p106 = scmp.eq.s32.totalorder %s14, 3
    %p107 = por %p105, %p106
    %p109 = scmp.ne.s32.totalorder %s92, %s108
    %p110 = scmp.eq.s32.totalorder %s14, 0
    %p111 = por %p109, %p110
    %p112 = scmp.le.s32.totalorder 1, %s8
    %p113 = scmp.lt.s32.totalorder %s8, 5
    %p114 = pnand %p112, %p113
    %p115 = pneg %p114
    // Predicated region
    $region9: #{atloss_pallas.1} parent=5 // pred_check
      _
    $region10: #{atloss_pallas.1} parent=5 // pred_check_branch
      %117 = sbr.rel (%p114) target = $region12
    $region11: #{atloss_pallas.1} parent=5 // pred_region
      %s118 = ssub.s32 %s8, 1
    $region12: #{atloss_pallas.1} parent=5 // pred_fallthru
      _
    %p119 = scmp.lt.s32.totalorder %s8, 4
    // Predicated region
    $region13: #{atloss_pallas.1} parent=5 // pred_check
      %p120 = pneg %p119
    $region14: #{atloss_pallas.1} parent=5 // pred_check_branch
      %122 = sbr.rel (%p120) target = $region16
    $region15: #{atloss_pallas.1} parent=5 // pred_region
      // Predicated region
      $region17: #{atloss_pallas.1} parent=15 // pred_check
        %p123 = pneg %p42
      $region18: #{atloss_pallas.1} parent=15 // pred_check_branch
        %125 = sbr.rel (%p123) target = $region20
      $region19: #{atloss_pallas.1} parent=15 // pred_region
        %p126 = scmp.lt.s32.totalorder %s15, 1
        %s127 = scalar_select %p126, %s15, 1
        %p128 = scmp.lt.s32.totalorder %s16, 1
        %s129 = scalar_select %p128, %s16, 1
        %s130 = smul.addr %s127, 2
        %s131 = sadd.s32 %s129, %s130
        %s132 = smul.addr %s131, 4
        %s133 = scalar_lea.vmem %s0, %s132
      $region20: #{atloss_pallas.1} parent=15 // pred_fallthru
        _
      // Predicated region
      $region21: #{atloss_pallas.1} parent=15 // pred_check
        %p134 = pneg %p70
      $region22: #{atloss_pallas.1} parent=15 // pred_check_branch
        %136 = sbr.rel (%p134) target = $region24
      $region23: #{atloss_pallas.1} parent=15 // pred_region
        %p137 = scmp.lt.s32.totalorder %s15, 1
        %s138 = scalar_select %p137, %s15, 1
        %p139 = scmp.lt.s32.totalorder %s16, 1
        %s140 = scalar_select %p139, %s16, 1
        %s141 = smul.addr %s138, 2
        %s142 = sadd.s32 %s140, %s141
        %s143 = smul.addr %s142, 4
        %s144 = scalar_lea.vmem %s1, %s143
      $region24: #{atloss_pallas.1} parent=15 // pred_fallthru
        _
    $region16: #{atloss_pallas.1} parent=5 // pred_fallthru
      _
    %p145 = scmp.le.s32.totalorder 1, %s8
    %p146 = scmp.lt.s32.totalorder %s8, 5
    %p147 = pnand %p145, %p146
    %p148 = pneg %p147
    // Predicated region
    $region25: #{atloss_pallas.1} parent=5 // pred_check
      _
    $region26: #{atloss_pallas.1} parent=5 // pred_check_branch
      %150 = sbr.rel (%p147) target = $region28
    $region27: #{atloss_pallas.1} parent=5 // pred_region
      %s151 = ssub.s32 %s8, 1
      %p152 = scmp.lt.s32.totalorder %s17, 1
      %s153 = scalar_select %p152, %s17, 1
      %p154 = scmp.lt.s32.totalorder %s18, 1
      %s155 = scalar_select %p154, %s18, 1
      %s156 = smul.addr %s153, 2
      %s157 = sadd.s32 %s155, %s156
      %s158 = smul.addr %s157, 4
      %s159 = scalar_lea.vmem %s0, %s158
      %p160 = pneg %p48
      %p161 = pneg %p45
      %p162 = scmp.lt.s32.totalorder %s17, 1
      %s163 = scalar_select %p162, %s17, 1
      %p164 = scmp.lt.s32.totalorder %s18, 1
      %s165 = scalar_select %p164, %s18, 1
      %s166 = smul.addr %s163, 2
      %s167 = sadd.s32 %s165, %s166
      %s168 = smul.addr %s167, 4
      %s169 = scalar_lea.vmem %s1, %s168
      %p170 = pneg %p76
      %p171 = pneg %p73
      %p172 = pneg %p104
      %p173 = pneg %p101
      %p174 = scmp.lt.s32.totalorder %s17, 1
      %s175 = scalar_select %p174, %s17, 1
      %p176 = scmp.lt.s32.totalorder %s18, 1
      %s177 = scalar_select %p176, %s18, 1
      %s178 = smul.addr %s175, 2
      %s179 = sadd.s32 %s177, %s178
      %s180 = smul.addr %s179, 8
      %s181 = scalar_lea.vmem %s2, %s180
      %p182 = scmp.lt.s32.totalorder %s17, 1
      %s183 = scalar_select %p182, %s17, 1
      %p184 = scmp.lt.s32.totalorder %s18, 1
      %s185 = scalar_select %p184, %s18, 1
      %s186 = smul.addr %s183, 2
      %s187 = sadd.s32 %s185, %s186
      %s188 = smul.addr %s187, 4
      %s189 = scalar_lea.vmem %s0, %s188
      %p190 = scmp.lt.s32.totalorder %s17, 1
      %s191 = scalar_select %p190, %s17, 1
      %p192 = scmp.lt.s32.totalorder %s18, 1
      %s193 = scalar_select %p192, %s18, 1
      %s194 = smul.addr %s191, 2
      %s195 = sadd.s32 %s193, %s194
      %s196 = smul.addr %s195, 4
      %s197 = scalar_lea.vmem %s1, %s196
      %p198 = scmp.lt.s32.totalorder %s17, 1
      %s199 = scalar_select %p198, %s17, 1
      %p200 = scmp.lt.s32.totalorder %s18, 1
      %s201 = scalar_select %p200, %s18, 1
      %s202 = smul.addr %s199, 2
      %s203 = sadd.s32 %s201, %s202
      %s204 = smul.addr %s203, 8
      %s205 = scalar_lea.vmem %s2, %s204
      %v206 = vld [vmem:[%s189] sm:$0xf]
      %v207 = vld [vmem:[%s197] sm:$0xf]
      %v208 = vsub.f32 %v206, %v207
      %vm209 = vcmask 1043456
      %v210 = vsel %vm209, %v208, 0.0
      %v211 = vrot.slane %v210, 4
      %v212 = vadd.f32 %v210, %v211
      %v213 = vrot.slane %v212, 2
      %v214 = vadd.f32 %v212, %v213
      %v215 = vrot.slane %v214, 1
      %v216 = vadd.f32 %v214, %v215
      %v217 = vmul.f32 %v216, 0.25
      %v218 = vmul.f32 %v217, %v217
      %v219 = vsel %vm209, %v206, -inf
      %v220 = vrot.slane %v219, 4
      %v221 = vmax.f32 %v219, %v220
      %v222 = vrot.slane %v221, 2
      %v223 = vmax.f32 %v221, %v222
      %v224 = vrot.slane %v223, 1
      %v225 = vmax.f32 %v223, %v224
      %v226 = vsel %vm209, %v207, -inf
      %v227 = vrot.slane %v226, 4
      %v228 = vmax.f32 %v226, %v227
      %v229 = vrot.slane %v228, 2
      %v230 = vmax.f32 %v228, %v229
      %v231 = vrot.slane %v230, 1
      %v232 = vmax.f32 %v230, %v231
      %v233 = vsub.f32 %v206, %v225
      %v234 = vmul.f32 %v233, 1.442695
      %v235 = vpow.pop %v234
      %v236 = vsub.f32 %v207, %v232
      %v237 = vmul.f32 %v236, 1.442695
      %v238 = vpow.pop %v237
      %v239 = vsel %vm209, %v235, 0.0
      %v240 = vrot.slane %v239, 4
      %v241 = vadd.f32 %v239, %v240
      %v242 = vrot.slane %v241, 2
      %v243 = vadd.f32 %v241, %v242
      %v244 = vrot.slane %v243, 1
      %v245 = vadd.f32 %v243, %v244
      %v246 = vsel %vm209, %v238, 0.0
      %v247 = vrot.slane %v246, 4
      %v248 = vadd.f32 %v246, %v247
      %v249 = vrot.slane %v248, 2
      %v250 = vadd.f32 %v248, %v249
      %v251 = vrot.slane %v250, 1
      %v252 = vadd.f32 %v250, %v251
      %v253 = vmul.f32 %v238, %v208
      %v254 = vsel %vm209, %v253, 0.0
      %v255 = vrot.slane %v254, 4
      %v256 = vadd.f32 %v254, %v255
      %v257 = vrot.slane %v256, 2
      %v258 = vadd.f32 %v256, %v257
      %v259 = vrot.slane %v258, 1
      %v260 = vadd.f32 %v258, %v259
      %v261 = vsub.f32 %v225, %v232
      %v262 = vlog2.pop %v245
      %v263 = vmul.f32 %v262, 0.6931472
      %v264 = vadd.f32 %v261, %v263
      %v265 = vlog2.pop %v252
      %v266 = vmul.f32 %v265, 0.6931472
      %v267 = vsub.f32 %v264, %v266
      %v268 = vrcp.pop %v252
      %v269 = vmul.f32 %v252, %v268
      %v270 = vsub.f32 1.0, %v269
      %v271 = vmul.f32 %v268, %v270
      %v272 = vadd.f32 %v268, %v271
      %vm273 = vweird.f32 %v252
      %vm274 = vweird.f32 %v268
      %vm275 = vmor %vm273, %vm274
      %v276 = vsel %vm275, %v268, %v272
      %v277 = vand.u32 2147483647, %v252
      %vm278 = vcmp.eq.f32.partialorder %v277, 8.507059e+37
      %v279 = vand.u32 %v252, 2147483648
      %v280 = vor.u32 1.1754944e-38, %v279
      %v281 = vsel %vm278, %v280, %v276
      %v282 = vmul.f32 %v260, %v281
      %v283 = vsub.f32 %v267, %v282
      %v284 = vadd.f32 %v218, %v283
      %vm285 = vcmask 1040384
      %v286 = vsel %vm285, %v284, 0.0
      %287 = vadd.xlane.f32.xlu0 %v286
      %v288 = vpop.xlane.xlu0 %287
      %v289 = vrot.slane %v288, 4
      %v290 = vadd.f32 %v288, %v289
      %v291 = vrot.slane %v290, 2
      %v292 = vadd.f32 %v290, %v291
      %v293 = vrot.slane %v292, 1
      %v294 = vadd.f32 %v292, %v293
      %s295 = vtos %v294
      %v296 = vstv %s295
      %v297 = vadd.f32 %v296, 0.0
      %298 = vst [vmem:[%s205] sm:$0xff] %v297
      %p299 = scmp.lt.s32.totalorder %s17, 1
      %s300 = scalar_select %p299, %s17, 1
      %p301 = scmp.lt.s32.totalorder %s18, 1
      %s302 = scalar_select %p301, %s18, 1
      %s303 = smul.addr %s300, 2
      %s304 = sadd.s32 %s302, %s303
      %s305 = smul.addr %s304, 8
      %s306 = scalar_lea.vmem %s2, %s305
      // Predicated region
      $region29: #{atloss_pallas.1} parent=27 // pred_check
        %p307 = pneg %p101
      $region30: #{atloss_pallas.1} parent=27 // pred_check_branch
        %309 = sbr.rel (%p307) target = $region32
      $region31: #{atloss_pallas.1} parent=27 // pred_region
        _
      $region32: #{atloss_pallas.1} parent=27 // pred_fallthru
        _
    $region28: #{atloss_pallas.1} parent=5 // pred_fallthru
      _
    %p310 = scmp.le.s32.totalorder 2, %s8
    // Predicated region
    $region33: #{atloss_pallas.1} parent=5 // pred_check
      %p311 = pneg %p310
    $region34: #{atloss_pallas.1} parent=5 // pred_check_branch
      %313 = sbr.rel (%p311) target = $region36
    $region35: #{atloss_pallas.1} parent=5 // pred_region
      %s314 = ssub.s32 %s8, 2
      // Predicated region
      $region37: #{atloss_pallas.1} parent=35 // pred_check
        %p315 = pneg %p107
      $region38: #{atloss_pallas.1} parent=35 // pred_check_branch
        %317 = sbr.rel (%p315) target = $region40
      $region39: #{atloss_pallas.1} parent=35 // pred_region
        %p318 = scmp.lt.s32.totalorder %s19, 1
        %s319 = scalar_select %p318, %s19, 1
        %p320 = scmp.lt.s32.totalorder %s20, 1
        %s321 = scalar_select %p320, %s20, 1
        %s322 = smul.addr %s319, 2
        %s323 = sadd.s32 %s321, %s322
        %s324 = smul.addr %s323, 8
        %s325 = scalar_lea.vmem %s2, %s324
      $region40: #{atloss_pallas.1} parent=35 // pred_fallthru
        _
    $region36: #{atloss_pallas.1} parent=5 // pred_fallthru
      _
  $region6: #{atloss_pallas.1} parent=0 // loop_footer
    %s12 = sadd.s32 1, %s8
  $region7: #{atloss_pallas.1} parent=0 // loop_footer_branch
    %7 = sbr.rel target = $region3
  $region8: #{atloss_pallas.1} parent=0 // loop_exit
    _

</llo_original>
